<compile_context>
chip_gen: v7x
topology: tpu7x:2x2x1
jax: 0.10.0
libtpu: 0.0.40
codegen_flags: <defaults>
</compile_context>

<pallas_src>
import jax
import jax.numpy as jnp
from jax import lax
from jax.experimental import pallas as pl
from jax.experimental.pallas import tpu as pltpu


# Target bytes per (single) input block; Pallas double-buffers it.
_IN_BLOCK_BYTES = 2 * 1024 * 1024


def _round_up(x, m):
    return ((x + m - 1) // m) * m


def _prod(xs):
    p = 1
    for v in xs:
        p *= v
    return p


# --------------------------------------------------------------------------
# Kernel 1: reduce the last (lane) axis of a 2-D (K, R) view -> (K, 1)
# --------------------------------------------------------------------------
def _make_lane_reduce_kernel(kt, rt, R, nr, chunk_w, n_chunks):
    mask_tail = (nr * rt) > R          # only the last reduction tile has a tail
    last_start = (nr - 1) * rt         # static column offset of the last tile

    def kernel(x_ref, o_ref, acc_ref):
        r = pl.program_id(1)

        @pl.when(r == 0)
        def _init():
            acc_ref[...] = jnp.zeros_like(acc_ref)

        def load_chunk(c, masked):
            xc = x_ref[:, pl.ds(c * chunk_w, chunk_w)].astype(jnp.float32)
            if masked:
                g0 = last_start + c * chunk_w
                if g0 + chunk_w > R:     # static: chunk straddles the boundary
                    col = g0 + lax.broadcasted_iota(jnp.int32, (kt, chunk_w), 1)
                    xc = jnp.where(col < R, xc, 0.0)
            return xc

        def accumulate(masked):
            # Sum chunks into a local value; ONE acc_ref update per grid step.
            partial = load_chunk(0, masked)
            for c in range(1, n_chunks):
                if masked and (last_start + c * chunk_w >= R):
                    break                # remaining chunks are fully past R
                partial = partial + load_chunk(c, masked)
            acc_ref[...] += partial

        if mask_tail:
            pl.when(r == nr - 1)(lambda: accumulate(True))
            pl.when(r < nr - 1)(lambda: accumulate(False))
        else:
            accumulate(False)

        @pl.when(r == nr - 1)
        def _finish():
            # Single cross-lane (XLU) reduce, deferred to the final step.
            o_ref[...] = jnp.sum(
                acc_ref[...], axis=-1, keepdims=True).astype(o_ref.dtype)

    return kernel


def _lane_tiles(K, R, itemsize):
    # Kept-rows tile (sublane side): multiple of 8 or the full extent.
    kt = min(K, 256)
    if kt == K and K >= 16:
        # Single kept block -> split it so v7x's two TensorCores both get work.
        kt = _round_up(pl.cdiv(K, 2), 8)
    # Reduction tile: multiple of 128 (or full extent), budgeted and capped so
    # the unrolled chunk loop stays small (<= 16 chunks).
    max_rt = (_IN_BLOCK_BYTES // max(kt * itemsize, 1)) // 128 * 128
    max_rt = max(128, min(2048, max_rt))
    rt = R if R <= max_rt else max_rt
    if rt % 128 == 0:
        chunk_w = 256 if rt % 256 == 0 else 128
    else:
        chunk_w = rt                     # only when rt == R (full-extent block)
    n_chunks = max(1, rt // chunk_w)
    return kt, rt, chunk_w, n_chunks


def _reduce_last_axis_2d(x2d):
    """x2d: (K, R) -> (K, 1), summing the last axis (f32 accumulation)."""
    K, R = x2d.shape
    itemsize = jnp.dtype(x2d.dtype).itemsize
    kt, rt, chunk_w, n_chunks = _lane_tiles(K, R, itemsize)
    nk = pl.cdiv(K, kt)
    nr = pl.cdiv(R, rt)

    # Explicit VMEM accounting: 2 input buffers + f32 acc + local partial + outs.
    est = (2 * kt * rt * itemsize
           + 2 * kt * chunk_w * 4
           + 4 * kt * itemsize)
    vmem_limit = int(max(32 << 20, 2 * est + (8 << 20)))

    kernel = _make_lane_reduce_kernel(kt, rt, R, nr, chunk_w, n_chunks)
    return pl.pallas_call(
        kernel,
        out_shape=jax.ShapeDtypeStruct((K, 1), x2d.dtype),
        grid_spec=pltpu.PrefetchScalarGridSpec(
            num_scalar_prefetch=0,
            grid=(nk, nr),
            in_specs=[pl.BlockSpec((kt, rt), lambda k, r: (k, r))],
            out_specs=pl.BlockSpec((kt, 1), lambda k, r: (k, 0)),
            scratch_shapes=[pltpu.VMEM((kt, chunk_w), jnp.float32)],
        ),
        compiler_params=pltpu.CompilerParams(
            dimension_semantics=("parallel", "arbitrary"),
            vmem_limit_bytes=vmem_limit,
        ),
    )(x2d)


# --------------------------------------------------------------------------
# Kernel 2: reduce the middle (sublane) axis of a 3-D (P, R, S) view -> (P,1,S)
# --------------------------------------------------------------------------
def _make_sublane_reduce_kernel(rt, st, R, nr, n_groups, rem):
    mask_tail = (nr * rt) > R
    last_start = (nr - 1) * rt

    def kernel(x_ref, o_ref, acc_ref):
        r = pl.program_id(2)

        @pl.when(r == 0)
        def _init():
            acc_ref[...] = jnp.zeros_like(acc_ref)

        def load_group(g, masked):
            xg = x_ref[pl.ds(g * 8, 8), :].astype(jnp.float32)
            if masked:
                g0 = last_start + g * 8
                if g0 + 8 > R:
                    row = g0 + lax.broadcasted_iota(jnp.int32, (8, st), 0)
                    xg = jnp.where(row < R, xg, 0.0)
            return xg

        def accumulate(masked):
            # Fold the block's rows into an (8, st) slab with VPU adds; a single
            # acc_ref update per grid step.
            partial = None
            for g in range(n_groups):
                if masked and (last_start + g * 8 >= R):
                    break
                xg = load_group(g, masked)
                partial = xg if partial is None else partial + xg
            if partial is not None:
                acc_ref[...] += partial

        if mask_tail:
            pl.when(r == nr - 1)(lambda: accumulate(True))
            pl.when(r < nr - 1)(lambda: accumulate(False))
        else:
            accumulate(False)

        @pl.when(r == nr - 1)
        def _finish():
            total = jnp.sum(acc_ref[...], axis=0, keepdims=True)
            if rem:
                # rem > 0 only when nr == 1 (rt == R, R % 8 != 0): add the last
                # partial row-group directly in the (only) step.
                tail = x_ref[pl.ds(n_groups * 8, rem), :].astype(jnp.float32)
                total = total + jnp.sum(tail, axis=0, keepdims=True)
            o_ref[...] = total.astype(o_ref.dtype)

    return kernel


def _sublane_tiles(P, R, S, itemsize):
    # Kept lane tile: multiple of 128 or the full extent (lane-dense output).
    st = min(S, 1024)
    if st == S and P == 1 and S >= 256:
        # Single parallel block -> split lanes so v7x's two TCs both get work.
        st = _round_up(pl.cdiv(S, 2), 128)
    # Reduced (sublane) tile: multiple of 8 or full extent, capped so the
    # unrolled fold loop stays small (<= 32 groups).
    max_rt = (_IN_BLOCK_BYTES // max(st * itemsize, 1)) // 8 * 8
    max_rt = max(8, min(256, max_rt))
    rt = R if R <= max_rt else max_rt
    return rt, st


def _reduce_middle_axis_3d(x3d):
    """x3d: (P, R, S) -> (P, 1, S), summing the middle axis (f32 accumulation)."""
    P, R, S = x3d.shape
    itemsize = jnp.dtype(x3d.dtype).itemsize
    rt, st = _sublane_tiles(P, R, S, itemsize)
    nr = pl.cdiv(R, rt)
    ns = pl.cdiv(S, st)
    n_groups = rt // 8
    rem = rt % 8

    est = (2 * rt * st * itemsize           # double-buffered input blocks
           + 2 * 8 * st * 4                 # (8, st) f32 acc + folded partial
           + 4 * st * itemsize)             # output blocks
    vmem_limit = int(max(32 << 20, 2 * est + (8 << 20)))

    kernel = _make_sublane_reduce_kernel(rt, st, R, nr, n_groups, rem)
    return pl.pallas_call(
        kernel,
        out_shape=jax.ShapeDtypeStruct((P, 1, S), x3d.dtype),
        grid_spec=pltpu.PrefetchScalarGridSpec(
            num_scalar_prefetch=0,
            grid=(P, ns, nr),
            in_specs=[pl.BlockSpec((None, rt, st), lambda p, s, r: (p, r, s))],
            out_specs=pl.BlockSpec((None, 1, st), lambda p, s, r: (p, 0, s)),
            scratch_shapes=[pltpu.VMEM((8, st), jnp.float32)],
        ),
        compiler_params=pltpu.CompilerParams(
            dimension_semantics=("parallel", "parallel", "arbitrary"),
            vmem_limit_bytes=vmem_limit,
        ),
    )(x3d)


# --------------------------------------------------------------------------
# Full reduction to a scalar (axis=None): two-stage sublane-dense reduction.
# --------------------------------------------------------------------------
def _full_reduce_scalar(x):
    n = x.size
    if n == 0:
        return jnp.zeros((), dtype=x.dtype)
    flat = x.reshape(-1)
    rows = next((c for c in (512, 256, 128, 64, 32, 16, 8)
                 if n % c == 0 and n // c >= 128), None)
    if rows is None:
        # Awkward (e.g. prime) sizes: a tiny zero-pad keeps the view
        # sublane-dense instead of a 1-row (1/8-occupancy) layout.
        pad = (-n) % 8
        if pad:
            flat = jnp.pad(flat, (0, pad))
        rows = 8
    L = flat.size // rows
    partial = _reduce_last_axis_2d(flat.reshape(rows, L))      # (rows, 1)
    total = _reduce_last_axis_2d(partial.reshape(1, rows))     # (1, 1)
    return total.reshape(()).astype(x.dtype)


# --------------------------------------------------------------------------
# Contiguous-group reducer (used by the composition for arbitrary axes).
# --------------------------------------------------------------------------
def _reduce_contiguous_group(x, a0, a1):
    """Sum over contiguous axes [a0..a1] of x, dropping them (free reshapes only)."""
    lead = x.shape[:a0]
    trail = x.shape[a1 + 1:]
    R = _prod(x.shape[a0:a1 + 1])
    if not trail:
        K = _prod(lead)
        out = _reduce_last_axis_2d(x.reshape(K, R))            # (K, 1)
        return out.reshape(lead)
    P = _prod(lead)
    S = _prod(trail)
    out = _reduce_middle_axis_3d(x.reshape(P, R, S))           # (P, 1, S)
    return out.reshape(lead + trail)


# --------------------------------------------------------------------------
# Module wrapper: TorchReduceSum(axis, keepdims, noop_with_empty_axes) semantics
# --------------------------------------------------------------------------
class PallasReduceSum:
    def __init__(self, axis, keepdims, noop_with_empty_axes):
        self.axis = axis
        self.keepdims = bool(keepdims)
        self.noop_with_empty_axes = bool(noop_with_empty_axes)

    def __call__(self, x):
        if self.axis is None:
            if self.noop_with_empty_axes:
                return x
            return _full_reduce_scalar(x)

        axes = self.axis if isinstance(self.axis, (tuple, list)) else (self.axis,)
        axes = tuple(sorted({int(a) % x.ndim for a in axes}))
        if not axes:
            # Empty axis list: treat like axis=None (ONNX "reduce all" default).
            if self.noop_with_empty_axes:
                return x
            out = _full_reduce_scalar(x)
            if self.keepdims:
                out = out.reshape((1,) * x.ndim)
            return out

        kept = tuple(a for a in range(x.ndim) if a not in axes)
        kept_shape = tuple(x.shape[a] for a in kept)
        R = _prod(tuple(x.shape[a] for a in axes))

        if x.size == 0 or R == 0:
            out = jnp.zeros(kept_shape, dtype=x.dtype)
        elif not kept:
            out = _full_reduce_scalar(x)
        else:
            # Split reduce axes into maximal contiguous runs and reduce them
            # from the highest run down (earlier axis indices stay valid).
            runs = []
            run_start = run_end = axes[0]
            for a in axes[1:]:
                if a == run_end + 1:
                    run_end = a
                else:
                    runs.append((run_start, run_end))
                    run_start = run_end = a
            runs.append((run_start, run_end))
            out = x
            for a0, a1 in reversed(runs):
                out = _reduce_contiguous_group(out, a0, a1)

        if self.keepdims:
            out = out.reshape(
                tuple(1 if a in axes else x.shape[a] for a in range(x.ndim)))
        return out


if __name__ == "__main__":
    key = jax.random.PRNGKey(0)
    x = jax.random.normal(key, (2, 4, 16, 16), dtype=jnp.float32)

    # Case 1: trailing spatial dims, keepdims=True (lane-reduce kernel).
    mod1 = PallasReduceSum(axis=(2, 3), keepdims=True, noop_with_empty_axes=False)
    y1 = jax.block_until_ready(mod1(x))
    ref1 = jnp.sum(x, axis=(2, 3), keepdims=True)
    assert y1.shape == ref1.shape and jnp.allclose(y1, ref1, rtol=1e-5, atol=1e-5)

    # Case 2: channel (middle) axis, keepdims=False (sublane kernel, no transpose).
    mod2 = PallasReduceSum(axis=1, keepdims=False, noop_with_empty_axes=False)
    y2 = jax.block_until_ready(mod2(x))
    ref2 = jnp.sum(x, axis=1)
    assert y2.shape == ref2.shape and jnp.allclose(y2, ref2, rtol=1e-5, atol=1e-5)

    # Case 3: axis=None -> scalar (two-stage lane reduce).
    mod3 = PallasReduceSum(axis=None, keepdims=False, noop_with_empty_axes=False)
    y3 = jax.block_until_ready(mod3(x))
    assert y3.shape == () and jnp.allclose(y3, jnp.sum(x), rtol=1e-5, atol=1e-4)

    # Case 4: axis=None, noop_with_empty_axes=True -> identity.
    mod4 = PallasReduceSum(axis=None, keepdims=False, noop_with_empty_axes=True)
    y4 = jax.block_until_ready(mod4(x))
    assert jnp.array_equal(y4, x)

    # Case 5: leading axis, keepdims=True (sublane kernel with P=1, split lanes).
    mod5 = PallasReduceSum(axis=0, keepdims=True, noop_with_empty_axes=False)
    y5 = jax.block_until_ready(mod5(x))
    ref5 = jnp.sum(x, axis=0, keepdims=True)
    assert y5.shape == ref5.shape and jnp.allclose(y5, ref5, rtol=1e-5, atol=1e-5)

    # Case 6: non-contiguous reduce axes -> composed lane+sublane kernels (no transpose).
    mod6 = PallasReduceSum(axis=(1, 3), keepdims=False, noop_with_empty_axes=False)
    y6 = jax.block_until_ready(mod6(x))
    ref6 = jnp.sum(x, axis=(1, 3))
    assert y6.shape == ref6.shape and jnp.allclose(y6, ref6, rtol=1e-5, atol=1e-5)

    # Case 7: awkward (non-divisible) full-reduction size exercises the padded path.
    x7 = jax.random.normal(jax.random.PRNGKey(1), (997,), dtype=jnp.float32)
    y7 = jax.block_until_ready(PallasReduceSum(None, False, False)(x7))
    assert jnp.allclose(y7, jnp.sum(x7), rtol=1e-4, atol=1e-3)

    print("KERNEL_OK")
</pallas_src>

<mosaic_0001>
module attributes {stable_mosaic.version = 11 : i64} {
  func.func @kernel(%arg0: i32, %arg1: i32, %arg2: memref<8x256xf32, #tpu.memory_space<vmem>>, %arg3: memref<8x1xf32, #tpu.memory_space<vmem>>, %arg4: memref<8x256xf32, #tpu.memory_space<vmem>>) attributes {dimension_semantics = [#tpu.dimension_semantics<parallel>, #tpu.dimension_semantics<arbitrary>], iteration_bounds = array<i64: 1, 1>, scalar_prefetch = 0 : i64, scratch_operands = 1 : i64, tpu.core_type = #tpu.core_type<tc>, window_params = [{transform_indices = @transform_0, window_bounds = array<i64: 8, 256>}, {transform_indices = @transform_1, window_bounds = array<i64: 8, 1>}]} {
    %c0_i32 = arith.constant 0 : i32
    %0 = arith.cmpi eq, %arg1, %c0_i32 : i32
    %1 = arith.extui %0 : i1 to i32
    %c0_i32_0 = arith.constant 0 : i32
    %2 = arith.cmpi ne, %1, %c0_i32_0 : i32
    scf.if %2 {
      %cst = arith.constant 0.000000e+00 : f32
      %10 = vector.broadcast %cst : f32 to vector<8x256xf32>
      %c0_8 = arith.constant 0 : index
      %c0_9 = arith.constant 0 : index
      %11 = vector.load %arg4[%c0_8, %c0_9] : memref<8x256xf32, #tpu.memory_space<vmem>>, vector<8x256xf32>
      tpu.vector_store %arg4[%c0_8, %c0_9], %10 {strides = array<i32>} : memref<8x256xf32, #tpu.memory_space<vmem>>, vector<8x256xf32>,
    } else {
    }
    %c0 = arith.constant 0 : index
    %c0_1 = arith.constant 0 : index
    %3 = vector.load %arg2[%c0, %c0_1] : memref<8x256xf32, #tpu.memory_space<vmem>>, vector<8x256xf32>
    %c0_2 = arith.constant 0 : index
    %c0_3 = arith.constant 0 : index
    %4 = vector.load %arg4[%c0_2, %c0_3] : memref<8x256xf32, #tpu.memory_space<vmem>>, vector<8x256xf32>
    %5 = arith.addf %4, %3 : vector<8x256xf32>
    %c0_4 = arith.constant 0 : index
    %c0_5 = arith.constant 0 : index
    %6 = vector.load %arg4[%c0_4, %c0_5] : memref<8x256xf32, #tpu.memory_space<vmem>>, vector<8x256xf32>
    tpu.vector_store %arg4[%c0_4, %c0_5], %5 {strides = array<i32>} : memref<8x256xf32, #tpu.memory_space<vmem>>, vector<8x256xf32>,
    %c0_i32_6 = arith.constant 0 : i32
    %7 = arith.cmpi eq, %arg1, %c0_i32_6 : i32
    %8 = arith.extui %7 : i1 to i32
    %c0_i32_7 = arith.constant 0 : i32
    %9 = arith.cmpi ne, %8, %c0_i32_7 : i32
    scf.if %9 {
      %c0_8 = arith.constant 0 : index
      %c0_9 = arith.constant 0 : index
      %10 = vector.load %arg4[%c0_8, %c0_9] : memref<8x256xf32, #tpu.memory_space<vmem>>, vector<8x256xf32>
      %cst = arith.constant dense<0.000000e+00> : vector<8xf32>
      %11 = vector.multi_reduction <add>, %10, %cst [1] : vector<8x256xf32> to vector<8xf32>
      %12 = vector.shape_cast %11 : vector<8xf32> to vector<8x1xf32>
      %c0_10 = arith.constant 0 : index
      %c0_11 = arith.constant 0 : index
      %13 = vector.load %arg3[%c0_10, %c0_11] : memref<8x1xf32, #tpu.memory_space<vmem>>, vector<8x1xf32>
      tpu.vector_store %arg3[%c0_10, %c0_11], %12 {strides = array<i32>} : memref<8x1xf32, #tpu.memory_space<vmem>>, vector<8x1xf32>,
    } else {
    }
    return
  }
  func.func @transform_0(%arg0: i32, %arg1: i32) -> (i32, i32) {
    %c0_i32 = arith.constant 0 : i32
    return %arg0, %arg1 : i32, i32
  }
  func.func @transform_1(%arg0: i32, %arg1: i32) -> (i32, i32) {
    %c0_i32 = arith.constant 0 : i32
    %c0_i32_0 = arith.constant 0 : i32
    return %arg0, %c0_i32 : i32, i32
  }
}

</mosaic_0001>

<llo_original>
// kernel: tpu_custom_call.1
$region0: #{tpu_custom_call.1}
  #allocation0 [shape = 'u32[]', space=smem, size = 0x4, offset = 0x4, fixed_abs, tag = 'smem constant byte address 0x4 - core index']
  #allocation1 [shape = 'u32[144,128]{1,0:T(1,128)}', space=vmem, size = 0x12000, scoped, tag = 'internal scratch']
  #allocation2 [shape = 'f32[8,256]{1,0:T(8,128)}', space=vmem, size = 0x2000, scoped, tag = 'scratch operand']
  %s0 = inlined_call_operand.hbm [shape: f32[8,256], index: 0, kind: input, shape index: {}]
  %s1 = inlined_call_operand.vmem [shape: f32[8,1], index: 1, kind: output, shape index: {}]
  %s2 = sld [smem:[#allocation0]]
  $region26: #{tpu_custom_call.1} parent=0
    _
  %s4 = ssub.s32 1, %s2
  %s5 = scalar_select 0, %s4, %s2
  $region1: #{tpu_custom_call.1} parent=0
    #allocation3 [shape = 'u8[8192]{0}', space=vmem, size = 0x2000, scoped, tag = 'input window, operand 0, single buffered']
    #allocation4 [shape = 's32[1]{0}', space=sflag, size = 0x4, scoped, tag = 'scoped memory for tpu_custom_call.1']
    %6 = vsyncpa [#allocation4], 0
    // Predicated region
    $region2: #{tpu_custom_call.1} parent=1 // pred_check
      _
    $region3: #{tpu_custom_call.1} parent=1 // pred_check_branch
      %8 = sbr.rel (0) target = $region5
    $region4: #{tpu_custom_call.1} parent=1 // pred_region
      %s10 = ssub.s32 256, 256
      %11 = vsyncadd [#allocation4], %s10
      %s13 = sshll.u32 [#allocation3], 4
      %s14 = int_to_ptr.vmem [resolvable:$true] %s13
      %16 = dma.hbm_to_vmem [thread:$0]  %s0, 256, %s14, [#allocation4]
    $region5: #{tpu_custom_call.1} parent=1 // pred_fallthru
      _
    // Predicated region
    $region6: #{tpu_custom_call.1} parent=1 // pred_check
      _
    $region7: #{tpu_custom_call.1} parent=1 // pred_check_branch
      %18 = sbr.rel (0) target = $region9
    $region8: #{tpu_custom_call.1} parent=1 // pred_region
      %19 = dma.done [#allocation4], 256
    $region9: #{tpu_custom_call.1} parent=1 // pred_fallthru
      _
    %p20 = scmp.eq.s32.totalorder 0, 0
    // Predicated region
    $region10: #{tpu_custom_call.1} parent=1 // pred_check
      %p21 = pneg %p20
    $region11: #{tpu_custom_call.1} parent=1 // pred_check_branch
      %23 = sbr.rel (%p21) target = $region13
    $region12: #{tpu_custom_call.1} parent=1 // pred_region
      %24 = vst [vmem:[#allocation2] sm:$0xff] 0.0
      %25 = vst [vmem:[#allocation2 + $0x8] sm:$0xff] 0.0
    $region13: #{tpu_custom_call.1} parent=1 // pred_fallthru
      _
    %v26 = vld [vmem:[#allocation3] sm:$0xff]
    %v27 = vld [vmem:[#allocation3 + $0x8] sm:$0xff]
    %v28 = vld [vmem:[#allocation2] sm:$0xff]
    %v29 = vld [vmem:[#allocation2 + $0x8] sm:$0xff]
    %v30 = vadd.f32 %v28, %v26
    %v31 = vadd.f32 %v29, %v27
    %32 = vst [vmem:[#allocation2] sm:$0xff] %v30
    %33 = vst [vmem:[#allocation2 + $0x8] sm:$0xff] %v31
    // Predicated region
    $region14: #{tpu_custom_call.1} parent=1 // pred_check
      %p34 = pneg %p20
    $region15: #{tpu_custom_call.1} parent=1 // pred_check_branch
      %36 = sbr.rel (%p34) target = $region17
    $region16: #{tpu_custom_call.1} parent=1 // pred_region
      %v37 = vld [vmem:[#allocation2] sm:$0xff]
      %v38 = vld [vmem:[#allocation2 + $0x8] sm:$0xff]
      %v39 = vadd.f32 %v37, %v38
      %40 = vadd.xlane.f32.xlu0 %v39
      %v41 = vpop.xlane.xlu0 %40
      %vm42 = vcmask 7168
      %43 = vst.msk [vmem:[%s1] sm:$0xff] %vm42, %v41
    $region17: #{tpu_custom_call.1} parent=1 // pred_fallthru
      _
    // Predicated region
    $region18: #{tpu_custom_call.1} parent=1 // pred_check
      _
    $region19: #{tpu_custom_call.1} parent=1 // pred_check_branch
      %45 = sbr.rel (0) target = $region21
    $region20: #{tpu_custom_call.1} parent=1 // pred_region
      _
    $region21: #{tpu_custom_call.1} parent=1 // pred_fallthru
      _
    // Predicated region
    $region22: #{tpu_custom_call.1} parent=1 // pred_check
      _
    $region23: #{tpu_custom_call.1} parent=1 // pred_check_branch
      %47 = sbr.rel (0) target = $region25
    $region24: #{tpu_custom_call.1} parent=1 // pred_region
      _
    $region25: #{tpu_custom_call.1} parent=1 // pred_fallthru
      _
    %48 = vsyncpa [#allocation4], 1

</llo_original>
